<compile_context>
chip_gen: v5e
topology: v5e:2x2
jax: 0.10.0
libtpu: 0.0.40
codegen_flags: <defaults>
</compile_context>

<pallas_src>
import math
import functools

import jax
import jax.numpy as jnp
from jax.experimental import pallas as pl
from jax.experimental.pallas import tpu as pltpu


def _bert_attention_kernel(
    xq_ref,      # (TQ, H)   f32   query tile of hidden_states (residual input)
    xkv_ref,     # (S, H)    bf16  full-sequence hidden_states (K/V source, read at t==0)
    wq_ref,      # (H, H)    bf16  query weight, (in, out), 1/sqrt(hd) folded in
    bq_ref,      # (1, H)    f32   1/sqrt(hd) folded in
    wkv_ref,     # (H, 2H)   bf16  fused [key | value] weight, (in, out)
    bkv_ref,     # (1, 2H)   f32
    wo_ref,      # (H, H)    bf16  output dense weight, (in, out)
    bo_ref,      # (1, H)    f32
    gamma_ref,   # (1, H)    f32   LayerNorm weight
    beta_ref,    # (1, H)    f32   LayerNorm bias
    o_ref,       # (TQ, H)
    kv_ref,      # (S, 2H)   bf16  VMEM scratch: cached K|V projection for this batch row
    *,
    num_heads: int,
    head_size: int,
    hidden: int,
    ln_eps: float,
):
    H, hd, NH = hidden, head_size, num_heads
    t = pl.program_id(1)

    # --- K|V projection: once per batch element, cached in VMEM scratch ------
    @pl.when(t == 0)
    def _():
        kv = jnp.dot(xkv_ref[...], wkv_ref[...], preferred_element_type=jnp.float32)
        kv_ref[...] = (kv + bkv_ref[...]).astype(jnp.bfloat16)

    x_f32 = xq_ref[...]                                    # (TQ, H) f32 residual
    # Q projection (scale already folded into wq/bq).
    q = jnp.dot(x_f32.astype(jnp.bfloat16), wq_ref[...],
                preferred_element_type=jnp.float32) + bq_ref[...]
    q_bf = q.astype(jnp.bfloat16)
    kv_bf = kv_ref[...]                                    # (S, 2H) bf16

    # --- split heads onto a leading (batch) axis ------------------------------
    # TODO(synk): lane-slice + stack keeps some XLU relayout work per step; a
    # grouped einshape split would shave a few % but is kept out for lowering
    # robustness.
    q3 = jnp.stack([q_bf[:, h * hd:(h + 1) * hd] for h in range(NH)], axis=0)           # (NH, TQ, hd)
    k3 = jnp.stack([kv_bf[:, h * hd:(h + 1) * hd] for h in range(NH)], axis=0)          # (NH, S,  hd)
    v3 = jnp.stack([kv_bf[:, H + h * hd:H + (h + 1) * hd] for h in range(NH)], axis=0)  # (NH, S,  hd)

    # --- batched scaled-dot-product attention (softmax in f32) ----------------
    scores = jnp.einsum("hqd,hkd->hqk", q3, k3,
                        preferred_element_type=jnp.float32)          # (NH, TQ, S)
    m = jnp.max(scores, axis=-1, keepdims=True)
    e = jnp.exp(scores - m)
    probs = e * pl.reciprocal(jnp.sum(e, axis=-1, keepdims=True), approx=True)

    ctx3 = jnp.einsum("hqk,hkd->hqd", probs.astype(jnp.bfloat16), v3,
                      preferred_element_type=jnp.float32)            # (NH, TQ, hd)

    # --- merge heads back onto lanes, then ONE wide output projection ---------
    ctx3_bf = ctx3.astype(jnp.bfloat16)
    ctx = jnp.concatenate([ctx3_bf[h] for h in range(NH)], axis=-1)  # (TQ, H) bf16
    out = jnp.dot(ctx, wo_ref[...], preferred_element_type=jnp.float32) + bo_ref[...]

    # --- residual + LayerNorm (f32) -------------------------------------------
    resid = out + x_f32
    mean = jnp.mean(resid, axis=-1, keepdims=True)
    centered = resid - mean
    var = jnp.mean(centered * centered, axis=-1, keepdims=True)
    y = centered * jax.lax.rsqrt(var + ln_eps) * gamma_ref[...] + beta_ref[...]

    o_ref[...] = y.astype(o_ref.dtype)


def prepare_params(params, *, num_heads: int):
    """One-time parameter preprocessing (transpose / fuse / cast / fold scale).

    nn.Linear stores W as (out, in); the kernel computes x @ W_t, so weights are
    pre-transposed.  Matmul operands are bf16 (MXU native); biases / LN params
    stay f32.  1/sqrt(head_size) is folded into Wq and bq here.
    """
    H = params["wq"].shape[0]
    hd = H // num_heads
    inv_sqrt_d = 1.0 / math.sqrt(hd)
    return {
        "wq": (params["wq"].T * inv_sqrt_d).astype(jnp.bfloat16),              # (H, H)
        "bq": (params["bq"] * inv_sqrt_d).reshape(1, H).astype(jnp.float32),
        "wkv": jnp.concatenate([params["wk"].T, params["wv"].T], axis=1
                               ).astype(jnp.bfloat16),                         # (H, 2H)
        "bkv": jnp.concatenate([params["bk"], params["bv"]]).reshape(1, 2 * H
                                                                     ).astype(jnp.float32),
        "wo": params["wo"].T.astype(jnp.bfloat16),                             # (H, H)
        "bo": params["bo"].reshape(1, H).astype(jnp.float32),
        "gamma": params["ln_w"].reshape(1, H).astype(jnp.float32),
        "beta": params["ln_b"].reshape(1, H).astype(jnp.float32),
    }


def bert_attention(x, p, *, num_heads: int, ln_eps: float = 1e-12):
    """x: (B, S, H) float32, p: prepare_params() output. Returns (B, S, H)."""
    B, S, H = x.shape
    assert H % num_heads == 0
    head_size = H // num_heads

    # Query-tile size.  With the KV cache, fused output projection and
    # single-buffered weights the working set stays small enough for TQ=256
    # even on v7x's 64 MiB VMEM (for BERT-scale S <= 512).
    TQ = 256 if S % 256 == 0 else (128 if S % 128 == 0 else S)
    n_qt = S // TQ

    x_kv = x.astype(jnp.bfloat16)   # full-sequence K/V source (half the DMA of f32)

    kernel = functools.partial(
        _bert_attention_kernel,
        num_heads=num_heads, head_size=head_size, hidden=H, ln_eps=ln_eps)

    const2 = lambda b, t: (0, 0)
    # Grid-invariant blocks: constant block index -> single-buffer (saves VMEM).
    wspec = lambda shape: pl.BlockSpec(shape, const2, pipeline_mode=pl.Buffered(1))

    # VMEM limit: physical capacity minus headroom, capped at 100 MiB
    # (v5e/v6e: 128 MiB -> 100 MiB; v7x: 64 MiB -> 48 MiB).
    try:
        vmem_cap = pltpu.get_tpu_info().vmem_capacity_bytes
        vmem_limit = int(min(vmem_cap - 16 * 1024 * 1024, 100 * 1024 * 1024))
    except Exception:
        vmem_limit = 48 * 1024 * 1024   # conservative fallback, safe on v7x too

    cost = pl.CostEstimate(
        flops=int(2 * B * S * (4 * H * H + 2 * S * H)),
        transcendentals=int(B * num_heads * S * S),
        bytes_accessed=int(B * S * H * (4 + 2 + 4) + 4 * H * H * 2 + 8 * H * 4),
    )

    return pl.pallas_call(
        kernel,
        out_shape=jax.ShapeDtypeStruct((B, S, H), x.dtype),
        grid_spec=pltpu.PrefetchScalarGridSpec(
            num_scalar_prefetch=0,
            grid=(B, n_qt),
            in_specs=[
                pl.BlockSpec((pl.Squeezed(), TQ, H), lambda b, t: (b, t, 0)),  # x query tile (f32)
                pl.BlockSpec((pl.Squeezed(), S, H), lambda b, t: (b, 0, 0)),   # x full seq (bf16)
                wspec((H, H)),        # Wq (scale folded)
                wspec((1, H)),        # bq (scale folded)
                wspec((H, 2 * H)),    # W[k|v]
                wspec((1, 2 * H)),    # b[k|v]
                wspec((H, H)),        # Wo
                wspec((1, H)),        # bo
                wspec((1, H)),        # LN gamma
                wspec((1, H)),        # LN beta
            ],
            out_specs=pl.BlockSpec((pl.Squeezed(), TQ, H), lambda b, t: (b, t, 0)),
            scratch_shapes=[pltpu.VMEM((S, 2 * H), jnp.bfloat16)],   # cached K|V
        ),
        compiler_params=pltpu.CompilerParams(
            # batch is sharded across TensorCores; the query-tile axis must be
            # "arbitrary" so the per-batch KV scratch is visited in order.
            dimension_semantics=("parallel", "arbitrary"),
            vmem_limit_bytes=vmem_limit,
        ),
        cost_estimate=cost,
    )(x, x_kv, p["wq"], p["bq"], p["wkv"], p["bkv"], p["wo"], p["bo"],
      p["gamma"], p["beta"])


def init_params(key, hidden_size: int):
    """Deterministic synthetic init mirroring the module's parameter shapes."""
    ks = jax.random.split(key, 8)
    std = 0.02
    H = hidden_size
    return {
        "wq": jax.random.normal(ks[0], (H, H), jnp.float32) * std,
        "bq": jax.random.normal(ks[1], (H,), jnp.float32) * std,
        "wk": jax.random.normal(ks[2], (H, H), jnp.float32) * std,
        "bk": jax.random.normal(ks[3], (H,), jnp.float32) * std,
        "wv": jax.random.normal(ks[4], (H, H), jnp.float32) * std,
        "bv": jax.random.normal(ks[5], (H,), jnp.float32) * std,
        "wo": jax.random.normal(ks[6], (H, H), jnp.float32) * std,
        "bo": jax.random.normal(ks[7], (H,), jnp.float32) * std,
        "ln_w": jnp.ones((H,), jnp.float32),
        "ln_b": jnp.zeros((H,), jnp.float32),
    }


def _reference(x, params, num_heads, ln_eps=1e-12):
    """Pure-JAX f32 reference of the PyTorch forward, for a sanity check."""
    B, S, H = x.shape
    hd = H // num_heads

    def lin(x, w, b):
        return jnp.einsum("bsh,oh->bso", x, w) + b

    q = lin(x, params["wq"], params["bq"]).reshape(B, S, num_heads, hd).transpose(0, 2, 1, 3)
    k = lin(x, params["wk"], params["bk"]).reshape(B, S, num_heads, hd).transpose(0, 2, 1, 3)
    v = lin(x, params["wv"], params["bv"]).reshape(B, S, num_heads, hd).transpose(0, 2, 1, 3)
    scores = jnp.einsum("bnqd,bnkd->bnqk", q, k) / math.sqrt(hd)
    probs = jax.nn.softmax(scores, axis=-1)
    ctx = jnp.einsum("bnqk,bnkd->bnqd", probs, v).transpose(0, 2, 1, 3).reshape(B, S, H)
    out = lin(ctx, params["wo"], params["bo"])
    resid = out + x
    mean = resid.mean(-1, keepdims=True)
    var = ((resid - mean) ** 2).mean(-1, keepdims=True)
    return (resid - mean) / jnp.sqrt(var + ln_eps) * params["ln_w"] + params["ln_b"]


if __name__ == "__main__":
    B, S, H, NH = 2, 8, 32, 4  # batch, seq, hidden, num_attention_heads

    key = jax.random.PRNGKey(0)
    k_x, k_p = jax.random.split(key)
    x = jax.random.normal(k_x, (B, S, H), jnp.float32)
    params = init_params(k_p, H)
    prepped = prepare_params(params, num_heads=NH)   # one-time weight prep

    out = bert_attention(x, prepped, num_heads=NH)
    out = jax.block_until_ready(out)

    ref = _reference(x, params, NH)
    assert out.shape == (B, S, H)
    max_err = float(jnp.max(jnp.abs(out - ref)))
    # bf16 MXU operands (f32 accumulation / softmax / LayerNorm) -> loosened tolerance.
    assert jnp.allclose(out, ref, atol=2e-2, rtol=2e-2), max_err

    print("KERNEL_OK")
</pallas_src>

<mosaic_0001>
module attributes {stable_mosaic.version = 11 : i64} {
  func.func @_bert_attention_kernel(%arg0: i32, %arg1: i32, %arg2: memref<1x8x32xf32, #tpu.memory_space<vmem>>, %arg3: memref<1x8x32xbf16, #tpu.memory_space<vmem>>, %arg4: memref<32x32xbf16, #tpu.memory_space<vmem>>, %arg5: memref<1x32xf32, #tpu.memory_space<vmem>>, %arg6: memref<32x64xbf16, #tpu.memory_space<vmem>>, %arg7: memref<1x64xf32, #tpu.memory_space<vmem>>, %arg8: memref<32x32xbf16, #tpu.memory_space<vmem>>, %arg9: memref<1x32xf32, #tpu.memory_space<vmem>>, %arg10: memref<1x32xf32, #tpu.memory_space<vmem>>, %arg11: memref<1x32xf32, #tpu.memory_space<vmem>>, %arg12: memref<1x8x32xf32, #tpu.memory_space<vmem>>, %arg13: memref<8x64xbf16, #tpu.memory_space<vmem>>) attributes {dimension_semantics = [#tpu.dimension_semantics<parallel>, #tpu.dimension_semantics<arbitrary>], iteration_bounds = array<i64: 2, 1>, scalar_prefetch = 0 : i64, scratch_operands = 1 : i64, tpu.core_type = #tpu.core_type<tc>, window_params = [{transform_indices = @transform_0, window_bounds = array<i64: 1, 8, 32>}, {transform_indices = @transform_1, window_bounds = array<i64: 1, 8, 32>}, {pipeline_mode = #tpu.pipeline_mode<synchronous>, transform_indices = @transform_2, window_bounds = array<i64: 32, 32>}, {pipeline_mode = #tpu.pipeline_mode<synchronous>, transform_indices = @transform_3, window_bounds = array<i64: 1, 32>}, {pipeline_mode = #tpu.pipeline_mode<synchronous>, transform_indices = @transform_4, window_bounds = array<i64: 32, 64>}, {pipeline_mode = #tpu.pipeline_mode<synchronous>, transform_indices = @transform_5, window_bounds = array<i64: 1, 64>}, {pipeline_mode = #tpu.pipeline_mode<synchronous>, transform_indices = @transform_6, window_bounds = array<i64: 32, 32>}, {pipeline_mode = #tpu.pipeline_mode<synchronous>, transform_indices = @transform_7, window_bounds = array<i64: 1, 32>}, {pipeline_mode = #tpu.pipeline_mode<synchronous>, transform_indices = @transform_8, window_bounds = array<i64: 1, 32>}, {pipeline_mode = #tpu.pipeline_mode<synchronous>, transform_indices = @transform_9, window_bounds = array<i64: 1, 32>}, {transform_indices = @transform_10, window_bounds = array<i64: 1, 8, 32>}]} {
    %c0_i32 = arith.constant 0 : i32
    %0 = arith.cmpi eq, %arg1, %c0_i32 : i32
    %1 = arith.extui %0 : i1 to i32
    %c0_i32_0 = arith.constant 0 : i32
    %2 = arith.cmpi ne, %1, %c0_i32_0 : i32
    scf.if %2 {
      %c0_30 = arith.constant 0 : index
      %c0_31 = arith.constant 0 : index
      %c0_32 = arith.constant 0 : index
      %94 = vector.load %arg3[%c0_30, %c0_31, %c0_32] : memref<1x8x32xbf16, #tpu.memory_space<vmem>>, vector<1x8x32xbf16>
      %95 = vector.shape_cast %94 : vector<1x8x32xbf16> to vector<8x32xbf16>
      %c0_33 = arith.constant 0 : index
      %c0_34 = arith.constant 0 : index
      %96 = vector.load %arg6[%c0_33, %c0_34] : memref<32x64xbf16, #tpu.memory_space<vmem>>, vector<32x64xbf16>
      %cst_35 = arith.constant dense<0.000000e+00> : vector<8x64xf32>
      %97 = tpu.matmul %95, %96, %cst_35 {dimension_numbers = #tpu.dot_dimension_numbers<[1], [0], [0], [1], [0, 0, 1, 1], [], []>} : vector<8x32xbf16>, vector<32x64xbf16>, vector<8x64xf32> -> vector<8x64xf32>
      %c0_36 = arith.constant 0 : index
      %c0_37 = arith.constant 0 : index
      %98 = vector.load %arg7[%c0_36, %c0_37] : memref<1x64xf32, #tpu.memory_space<vmem>>, vector<1x64xf32>
      %99 = vector.broadcast %98 : vector<1x64xf32> to vector<8x64xf32>
      %100 = arith.addf %97, %99 : vector<8x64xf32>
      %101 = arith.truncf %100 : vector<8x64xf32> to vector<8x64xbf16>
      %c0_38 = arith.constant 0 : index
      %c0_39 = arith.constant 0 : index
      %102 = vector.load %arg13[%c0_38, %c0_39] : memref<8x64xbf16, #tpu.memory_space<vmem>>, vector<8x64xbf16>
      tpu.vector_store %arg13[%c0_38, %c0_39], %101 {strides = array<i32>} : memref<8x64xbf16, #tpu.memory_space<vmem>>, vector<8x64xbf16>,
    } else {
    }
    %c0 = arith.constant 0 : index
    %c0_1 = arith.constant 0 : index
    %c0_2 = arith.constant 0 : index
    %3 = vector.load %arg2[%c0, %c0_1, %c0_2] : memref<1x8x32xf32, #tpu.memory_space<vmem>>, vector<1x8x32xf32>
    %4 = vector.shape_cast %3 : vector<1x8x32xf32> to vector<8x32xf32>
    %5 = arith.truncf %4 : vector<8x32xf32> to vector<8x32xbf16>
    %c0_3 = arith.constant 0 : index
    %c0_4 = arith.constant 0 : index
    %6 = vector.load %arg4[%c0_3, %c0_4] : memref<32x32xbf16, #tpu.memory_space<vmem>>, vector<32x32xbf16>
    %cst = arith.constant dense<0.000000e+00> : vector<8x32xf32>
    %7 = tpu.matmul %5, %6, %cst {dimension_numbers = #tpu.dot_dimension_numbers<[1], [0], [0], [1], [0, 0, 1, 1], [], []>} : vector<8x32xbf16>, vector<32x32xbf16>, vector<8x32xf32> -> vector<8x32xf32>
    %c0_5 = arith.constant 0 : index
    %c0_6 = arith.constant 0 : index
    %8 = vector.load %arg5[%c0_5, %c0_6] : memref<1x32xf32, #tpu.memory_space<vmem>>, vector<1x32xf32>
    %9 = vector.broadcast %8 : vector<1x32xf32> to vector<8x32xf32>
    %10 = arith.addf %7, %9 : vector<8x32xf32>
    %11 = arith.truncf %10 : vector<8x32xf32> to vector<8x32xbf16>
    %c0_7 = arith.constant 0 : index
    %c0_8 = arith.constant 0 : index
    %12 = vector.load %arg13[%c0_7, %c0_8] : memref<8x64xbf16, #tpu.memory_space<vmem>>, vector<8x64xbf16>
    %13 = vector.extract_strided_slice %11 {offsets = [0, 0], sizes = [8, 8], strides = [1, 1]} : vector<8x32xbf16> to vector<8x8xbf16>
    %14 = vector.extract_strided_slice %11 {offsets = [0, 8], sizes = [8, 8], strides = [1, 1]} : vector<8x32xbf16> to vector<8x8xbf16>
    %15 = vector.extract_strided_slice %11 {offsets = [0, 16], sizes = [8, 8], strides = [1, 1]} : vector<8x32xbf16> to vector<8x8xbf16>
    %16 = vector.extract_strided_slice %11 {offsets = [0, 24], sizes = [8, 8], strides = [1, 1]} : vector<8x32xbf16> to vector<8x8xbf16>
    %17 = vector.shape_cast %13 : vector<8x8xbf16> to vector<1x8x8xbf16>
    %18 = vector.shape_cast %14 : vector<8x8xbf16> to vector<1x8x8xbf16>
    %19 = vector.shape_cast %15 : vector<8x8xbf16> to vector<1x8x8xbf16>
    %20 = vector.shape_cast %16 : vector<8x8xbf16> to vector<1x8x8xbf16>
    %21 = tpu.concatenate %17, %18, %19, %20 in 0 : vector<1x8x8xbf16>, vector<1x8x8xbf16>, vector<1x8x8xbf16>, vector<1x8x8xbf16> -> vector<4x8x8xbf16>
    %22 = vector.extract_strided_slice %12 {offsets = [0, 0], sizes = [8, 8], strides = [1, 1]} : vector<8x64xbf16> to vector<8x8xbf16>
    %23 = vector.extract_strided_slice %12 {offsets = [0, 8], sizes = [8, 8], strides = [1, 1]} : vector<8x64xbf16> to vector<8x8xbf16>
    %24 = vector.extract_strided_slice %12 {offsets = [0, 16], sizes = [8, 8], strides = [1, 1]} : vector<8x64xbf16> to vector<8x8xbf16>
    %25 = vector.extract_strided_slice %12 {offsets = [0, 24], sizes = [8, 8], strides = [1, 1]} : vector<8x64xbf16> to vector<8x8xbf16>
    %26 = vector.shape_cast %22 : vector<8x8xbf16> to vector<1x8x8xbf16>
    %27 = vector.shape_cast %23 : vector<8x8xbf16> to vector<1x8x8xbf16>
    %28 = vector.shape_cast %24 : vector<8x8xbf16> to vector<1x8x8xbf16>
    %29 = vector.shape_cast %25 : vector<8x8xbf16> to vector<1x8x8xbf16>
    %30 = tpu.concatenate %26, %27, %28, %29 in 0 : vector<1x8x8xbf16>, vector<1x8x8xbf16>, vector<1x8x8xbf16>, vector<1x8x8xbf16> -> vector<4x8x8xbf16>
    %31 = vector.extract_strided_slice %12 {offsets = [0, 32], sizes = [8, 8], strides = [1, 1]} : vector<8x64xbf16> to vector<8x8xbf16>
    %32 = vector.extract_strided_slice %12 {offsets = [0, 40], sizes = [8, 8], strides = [1, 1]} : vector<8x64xbf16> to vector<8x8xbf16>
    %33 = vector.extract_strided_slice %12 {offsets = [0, 48], sizes = [8, 8], strides = [1, 1]} : vector<8x64xbf16> to vector<8x8xbf16>
    %34 = vector.extract_strided_slice %12 {offsets = [0, 56], sizes = [8, 8], strides = [1, 1]} : vector<8x64xbf16> to vector<8x8xbf16>
    %35 = vector.shape_cast %31 : vector<8x8xbf16> to vector<1x8x8xbf16>
    %36 = vector.shape_cast %32 : vector<8x8xbf16> to vector<1x8x8xbf16>
    %37 = vector.shape_cast %33 : vector<8x8xbf16> to vector<1x8x8xbf16>
    %38 = vector.shape_cast %34 : vector<8x8xbf16> to vector<1x8x8xbf16>
    %39 = tpu.concatenate %35, %36, %37, %38 in 0 : vector<1x8x8xbf16>, vector<1x8x8xbf16>, vector<1x8x8xbf16>, vector<1x8x8xbf16> -> vector<4x8x8xbf16>
    "tpu.trace_start"() <{level = 10 : i32, message = "hqd,hkd->hqk"}> : () -> ()
    %cst_9 = arith.constant dense<0.000000e+00> : vector<4x8x8xf32>
    %40 = tpu.matmul %21, %30, %cst_9 {dimension_numbers = #tpu.dot_dimension_numbers<[2], [2], [1], [1], [0, 0, 0, 1, 1, 1], [0], [0]>} : vector<4x8x8xbf16>, vector<4x8x8xbf16>, vector<4x8x8xf32> -> vector<4x8x8xf32>
    "tpu.trace_stop"() : () -> ()
    %cst_10 = arith.constant dense<0xFF800000> : vector<4x8xf32>
    %41 = vector.multi_reduction <maximumf>, %40, %cst_10 [2] : vector<4x8x8xf32> to vector<4x8xf32>
    %42 = vector.shape_cast %41 : vector<4x8xf32> to vector<4x8x1xf32>
    %43 = vector.broadcast %42 : vector<4x8x1xf32> to vector<4x8x8xf32>
    %44 = arith.subf %40, %43 : vector<4x8x8xf32>
    %45 = math.exp %44 : vector<4x8x8xf32>
    %cst_11 = arith.constant dense<0.000000e+00> : vector<4x8xf32>
    %46 = vector.multi_reduction <add>, %45, %cst_11 [2] : vector<4x8x8xf32> to vector<4x8xf32>
    %47 = vector.shape_cast %46 : vector<4x8xf32> to vector<4x8x1xf32>
    %48 = tpu.reciprocal %47 {approx = true} : vector<4x8x1xf32> -> vector<4x8x1xf32>
    %49 = vector.broadcast %48 : vector<4x8x1xf32> to vector<4x8x8xf32>
    %50 = arith.mulf %45, %49 : vector<4x8x8xf32>
    %51 = arith.truncf %50 : vector<4x8x8xf32> to vector<4x8x8xbf16>
    "tpu.trace_start"() <{level = 10 : i32, message = "hqk,hkd->hqd"}> : () -> ()
    %cst_12 = arith.constant dense<0.000000e+00> : vector<4x8x8xf32>
    %52 = tpu.matmul %51, %39, %cst_12 {dimension_numbers = #tpu.dot_dimension_numbers<[2], [1], [1], [2], [0, 0, 0, 1, 1, 2], [0], [0]>} : vector<4x8x8xbf16>, vector<4x8x8xbf16>, vector<4x8x8xf32> -> vector<4x8x8xf32>
    "tpu.trace_stop"() : () -> ()
    %53 = arith.truncf %52 : vector<4x8x8xf32> to vector<4x8x8xbf16>
    %54 = vector.extract_strided_slice %53 {offsets = [0, 0, 0], sizes = [1, 8, 8], strides = [1, 1, 1]} : vector<4x8x8xbf16> to vector<1x8x8xbf16>
    %55 = vector.shape_cast %54 : vector<1x8x8xbf16> to vector<8x8xbf16>
    %56 = vector.extract_strided_slice %53 {offsets = [1, 0, 0], sizes = [1, 8, 8], strides = [1, 1, 1]} : vector<4x8x8xbf16> to vector<1x8x8xbf16>
    %57 = vector.shape_cast %56 : vector<1x8x8xbf16> to vector<8x8xbf16>
    %58 = vector.extract_strided_slice %53 {offsets = [2, 0, 0], sizes = [1, 8, 8], strides = [1, 1, 1]} : vector<4x8x8xbf16> to vector<1x8x8xbf16>
    %59 = vector.shape_cast %58 : vector<1x8x8xbf16> to vector<8x8xbf16>
    %60 = vector.extract_strided_slice %53 {offsets = [3, 0, 0], sizes = [1, 8, 8], strides = [1, 1, 1]} : vector<4x8x8xbf16> to vector<1x8x8xbf16>
    %61 = vector.shape_cast %60 : vector<1x8x8xbf16> to vector<8x8xbf16>
    %62 = tpu.concatenate %55, %57, %59, %61 in 1 : vector<8x8xbf16>, vector<8x8xbf16>, vector<8x8xbf16>, vector<8x8xbf16> -> vector<8x32xbf16>
    %c0_13 = arith.constant 0 : index
    %c0_14 = arith.constant 0 : index
    %63 = vector.load %arg8[%c0_13, %c0_14] : memref<32x32xbf16, #tpu.memory_space<vmem>>, vector<32x32xbf16>
    %cst_15 = arith.constant dense<0.000000e+00> : vector<8x32xf32>
    %64 = tpu.matmul %62, %63, %cst_15 {dimension_numbers = #tpu.dot_dimension_numbers<[1], [0], [0], [1], [0, 0, 1, 1], [], []>} : vector<8x32xbf16>, vector<32x32xbf16>, vector<8x32xf32> -> vector<8x32xf32>
    %c0_16 = arith.constant 0 : index
    %c0_17 = arith.constant 0 : index
    %65 = vector.load %arg9[%c0_16, %c0_17] : memref<1x32xf32, #tpu.memory_space<vmem>>, vector<1x32xf32>
    %66 = vector.broadcast %65 : vector<1x32xf32> to vector<8x32xf32>
    %67 = arith.addf %64, %66 : vector<8x32xf32>
    %68 = arith.addf %67, %4 : vector<8x32xf32>
    %cst_18 = arith.constant dense<0.000000e+00> : vector<8xf32>
    %69 = vector.multi_reduction <add>, %68, %cst_18 [1] : vector<8x32xf32> to vector<8xf32>
    %70 = vector.shape_cast %69 : vector<8xf32> to vector<8x1xf32>
    %cst_19 = arith.constant 3.200000e+01 : f32
    %71 = vector.broadcast %cst_19 : f32 to vector<8x1xf32>
    %72 = arith.divf %70, %71 : vector<8x1xf32>
    %73 = vector.broadcast %72 : vector<8x1xf32> to vector<8x32xf32>
    %74 = arith.subf %68, %73 : vector<8x32xf32>
    %75 = arith.mulf %74, %74 : vector<8x32xf32>
    %cst_20 = arith.constant dense<0.000000e+00> : vector<8xf32>
    %76 = vector.multi_reduction <add>, %75, %cst_20 [1] : vector<8x32xf32> to vector<8xf32>
    %77 = vector.shape_cast %76 : vector<8xf32> to vector<8x1xf32>
    %cst_21 = arith.constant 3.200000e+01 : f32
    %78 = vector.broadcast %cst_21 : f32 to vector<8x1xf32>
    %79 = arith.divf %77, %78 : vector<8x1xf32>
    %cst_22 = arith.constant 9.99999996E-13 : f32
    %80 = vector.broadcast %cst_22 : f32 to vector<8x1xf32>
    %81 = arith.addf %79, %80 : vector<8x1xf32>
    %82 = math.rsqrt %81 : vector<8x1xf32>
    %83 = vector.broadcast %82 : vector<8x1xf32> to vector<8x32xf32>
    %84 = arith.mulf %74, %83 : vector<8x32xf32>
    %c0_23 = arith.constant 0 : index
    %c0_24 = arith.constant 0 : index
    %85 = vector.load %arg10[%c0_23, %c0_24] : memref<1x32xf32, #tpu.memory_space<vmem>>, vector<1x32xf32>
    %86 = vector.broadcast %85 : vector<1x32xf32> to vector<8x32xf32>
    %87 = arith.mulf %84, %86 : vector<8x32xf32>
    %c0_25 = arith.constant 0 : index
    %c0_26 = arith.constant 0 : index
    %88 = vector.load %arg11[%c0_25, %c0_26] : memref<1x32xf32, #tpu.memory_space<vmem>>, vector<1x32xf32>
    %89 = vector.broadcast %88 : vector<1x32xf32> to vector<8x32xf32>
    %90 = arith.addf %87, %89 : vector<8x32xf32>
    %c0_27 = arith.constant 0 : index
    %c0_28 = arith.constant 0 : index
    %c0_29 = arith.constant 0 : index
    %91 = vector.load %arg12[%c0_27, %c0_28, %c0_29] : memref<1x8x32xf32, #tpu.memory_space<vmem>>, vector<1x8x32xf32>
    %92 = vector.shape_cast %91 : vector<1x8x32xf32> to vector<8x32xf32>
    %93 = vector.shape_cast %90 : vector<8x32xf32> to vector<1x8x32xf32>
    tpu.vector_store %arg12[%c0_27, %c0_28, %c0_29], %93 {strides = array<i32>} : memref<1x8x32xf32, #tpu.memory_space<vmem>>, vector<1x8x32xf32>,
    return
  }
  func.func @transform_0(%arg0: i32, %arg1: i32) -> (i32, i32, i32) {
    %c0_i32 = arith.constant 0 : i32
    %c0_i32_0 = arith.constant 0 : i32
    return %arg0, %arg1, %c0_i32 : i32, i32, i32
  }
  func.func @transform_1(%arg0: i32, %arg1: i32) -> (i32, i32, i32) {
    %c0_i32 = arith.constant 0 : i32
    %c0_i32_0 = arith.constant 0 : i32
    %c0_i32_1 = arith.constant 0 : i32
    return %arg0, %c0_i32, %c0_i32_0 : i32, i32, i32
  }
  func.func @transform_2(%arg0: i32, %arg1: i32) -> (i32, i32) {
    %c0_i32 = arith.constant 0 : i32
    %c0_i32_0 = arith.constant 0 : i32
    %c0_i32_1 = arith.constant 0 : i32
    return %c0_i32, %c0_i32_0 : i32, i32
  }
  func.func @transform_3(%arg0: i32, %arg1: i32) -> (i32, i32) {
    %c0_i32 = arith.constant 0 : i32
    %c0_i32_0 = arith.constant 0 : i32
    %c0_i32_1 = arith.constant 0 : i32
    return %c0_i32, %c0_i32_0 : i32, i32
  }
  func.func @transform_4(%arg0: i32, %arg1: i32) -> (i32, i32) {
    %c0_i32 = arith.constant 0 : i32
    %c0_i32_0 = arith.constant 0 : i32
    %c0_i32_1 = arith.constant 0 : i32
    return %c0_i32, %c0_i32_0 : i32, i32
  }
  func.func @transform_5(%arg0: i32, %arg1: i32) -> (i32, i32) {
    %c0_i32 = arith.constant 0 : i32
    %c0_i32_0 = arith.constant 0 : i32
    %c0_i32_1 = arith.constant 0 : i32
    return %c0_i32, %c0_i32_0 : i32, i32
  }
  func.func @transform_6(%arg0: i32, %arg1: i32) -> (i32, i32) {
    %c0_i32 = arith.constant 0 : i32
    %c0_i32_0 = arith.constant 0 : i32
    %c0_i32_1 = arith.constant 0 : i32
    return %c0_i32, %c0_i32_0 : i32, i32
  }
  func.func @transform_7(%arg0: i32, %arg1: i32) -> (i32, i32) {
    %c0_i32 = arith.constant 0 : i32
    %c0_i32_0 = arith.constant 0 : i32
    %c0_i32_1 = arith.constant 0 : i32
    return %c0_i32, %c0_i32_0 : i32, i32
  }
  func.func @transform_8(%arg0: i32, %arg1: i32) -> (i32, i32) {
    %c0_i32 = arith.constant 0 : i32
    %c0_i32_0 = arith.constant 0 : i32
    %c0_i32_1 = arith.constant 0 : i32
    return %c0_i32, %c0_i32_0 : i32, i32
  }
  func.func @transform_9(%arg0: i32, %arg1: i32) -> (i32, i32) {
    %c0_i32 = arith.constant 0 : i32
    %c0_i32_0 = arith.constant 0 : i32
    %c0_i32_1 = arith.constant 0 : i32
    return %c0_i32, %c0_i32_0 : i32, i32
  }
  func.func @transform_10(%arg0: i32, %arg1: i32) -> (i32, i32, i32) {
    %c0_i32 = arith.constant 0 : i32
    %c0_i32_0 = arith.constant 0 : i32
    return %arg0, %arg1, %c0_i32 : i32, i32, i32
  }
}

</mosaic_0001>

<llo_original>
// kernel: tpu_custom_call.1
$region0: #{tpu_custom_call.1}
  #allocation0 [shape = 'u32[]', space=smem, size = 0x4, offset = 0x4, fixed_abs, tag = 'smem constant byte address 0x4 - core index']
  #allocation1 [shape = 'u32[72,128]{1,0:T(1,128)}', space=vmem, size = 0x9000, scoped, tag = 'internal scratch']
  #allocation2 [shape = 'bf16[8,64]{1,0:T(8,128)(2,1)}', space=vmem, size = 0x800, scoped, tag = 'scratch operand']
  %s0 = inlined_call_operand.hbm [shape: f32[2,8,32], index: 0, kind: input, shape index: {}]
  %s1 = inlined_call_operand.hbm [shape: bf16[2,8,32], index: 1, kind: input, shape index: {}]
  %s2 = inlined_call_operand.hbm [shape: bf16[32,32], index: 2, kind: input, shape index: {}]
  %s3 = inlined_call_operand.vmem [shape: f32[1,32], index: 3, kind: input, shape index: {}]
  %s4 = inlined_call_operand.hbm [shape: bf16[32,64], index: 4, kind: input, shape index: {}]
  %s5 = inlined_call_operand.vmem [shape: f32[1,64], index: 5, kind: input, shape index: {}]
  %s6 = inlined_call_operand.hbm [shape: bf16[32,32], index: 6, kind: input, shape index: {}]
  %s7 = inlined_call_operand.vmem [shape: f32[1,32], index: 7, kind: input, shape index: {}]
  %s8 = inlined_call_operand.vmem [shape: f32[1,32], index: 8, kind: input, shape index: {}]
  %s9 = inlined_call_operand.vmem [shape: f32[1,32], index: 9, kind: input, shape index: {}]
  %s10 = inlined_call_operand.hbm [shape: f32[2,8,32], index: 10, kind: output, shape index: {}]
  %s11 = sld [smem:[#allocation0]]
  $region97: #{tpu_custom_call.1} parent=0
    _
  %s13 = ssub.s32 1, %s11
  %s14 = scalar_select 0, %s13, %s11
  $region1: #{tpu_custom_call.1} parent=0
    #allocation3 [shape = 'u8[8192]{0}', space=vmem, size = 0x2000, scoped, tag = 'input window, operand 0']
    #allocation4 [shape = 's32[2]{0}', space=sflag, size = 0x8, scoped, tag = 'scoped memory for tpu_custom_call.1']
    #allocation5 [shape = 's32[2]{0}', space=sflag, size = 0x8, scoped, tag = 'scoped memory for tpu_custom_call.1']
    #allocation6 [shape = 'u8[4096]{0}', space=vmem, size = 0x1000, scoped, tag = 'input window, operand 1']
    #allocation7 [shape = 's32[2]{0}', space=sflag, size = 0x8, scoped, tag = 'scoped memory for tpu_custom_call.1']
    #allocation8 [shape = 'u8[8192]{0}', space=vmem, size = 0x2000, scoped, tag = 'input window, operand 2, single buffered']
    #allocation9 [shape = 'u8[8192]{0}', space=vmem, size = 0x2000, scoped, tag = 'input window, operand 4, single buffered']
    #allocation10 [shape = 's32[1]{0}', space=sflag, size = 0x4, scoped, tag = 'scoped memory for tpu_custom_call.1']
    #allocation11 [shape = 'u8[8192]{0}', space=vmem, size = 0x2000, scoped, tag = 'input window, operand 6, single buffered']
    #allocation12 [shape = 'u8[8192]{0}', space=vmem, size = 0x2000, scoped, tag = 'output window, operand 0']
    %15 = vsyncpa [#allocation4], 0
    %s16 = scalar_lea.sflag [#allocation4], 1
    %17 = vsyncpa %s16, 0
    %18 = vsyncpa [#allocation7], 0
    %s19 = scalar_lea.sflag [#allocation7], 1
    %20 = vsyncpa %s19, 0
    %21 = vsyncpa [#allocation10], 0
    %22 = vsyncpa [#allocation5], 0
    %s23 = scalar_lea.sflag [#allocation5], 1
    %24 = vsyncpa %s23, 0
    loop: start=0, step=1, limit=4
    $region2: #{tpu_custom_call.1} parent=1 // loop_pre_header
      _
    $region3: #{tpu_custom_call.1} parent=1 // loop_header
      %s26 = sphi 0, %s30
      %p27 = scmp.ge.s32.totalorder %s26, 4
      %s33 = sphi 0, %s45
      %s34 = sphi 0, %s41
      %s35 = sphi 0, %s33
      %s36 = sphi 0, %s34
      %s37 = sphi 0, %s35
      %s38 = sphi 0, %s36
      %s50 = sphi 0, %s52
      %s53 = sphi 0, %s50
      %s54 = sphi 0, %s53
      %s70 = sphi 0, %s54
      %s76 = sphi 0, %s78
      %s79 = sphi 0, %s76
      %s80 = sphi 0, %s79
      %s96 = sphi 0, %s80
      %s100 = sphi 0, %s100
      %s102 = sphi 0, %s100
      %s103 = sphi 0, %s102
      %s117 = sphi 0, %s103
      %s121 = sphi 0, %s121
      %s123 = sphi 0, %s121
      %s124 = sphi 0, %s123
      %s138 = sphi 0, %s124
      %s142 = sphi 0, %s142
      %s144 = sphi 0, %s142
      %s145 = sphi 0, %s144
      %s159 = sphi 0, %s145
      %s163 = sphi 0, %s163
      %s165 = sphi 0, %s163
      %s166 = sphi 0, %s165
      %s180 = sphi 0, %s166
      %s184 = sphi 0, %s184
      %s186 = sphi 0, %s184
      %s187 = sphi 0, %s186
      %s201 = sphi 0, %s187
      %s205 = sphi 0, %s205
      %s207 = sphi 0, %s205
      %s208 = sphi 0, %s207
      %s222 = sphi 0, %s208
      %s226 = sphi 0, %s226
      %s228 = sphi 0, %s226
      %s229 = sphi 0, %s228
      %s243 = sphi 0, %s229
      %s247 = sphi 0, %s247
      %s249 = sphi 0, %s247
      %s250 = sphi 0, %s249
      %s264 = sphi 0, %s250
      %s272 = sphi 0, %s274
      %s275 = sphi 0, %s272
      %s276 = sphi 0, %s275
      %s292 = sphi 0, %s276
    $region4: #{tpu_custom_call.1} parent=1 // loop_header_branch
      %29 = sbr.rel (%p27) target = $region8
    $region5: #{tpu_custom_call.1} parent=1 // loop_body
      %s31 = ssub.s32 %s26, 1
      %s32 = ssub.s32 %s26, 2
      %s39 = sadd.s32 1, %s34
      %p40 = scmp.ge.s32.totalorder %s39, 1
      %s41 = scalar_select %p40, 0, %s39
      %s42 = sadd.s32 1, %s33
      %s43 = scalar_select %p40, %s42, %s33
      %p44 = scmp.ge.s32.totalorder %s43, 2
      %s45 = scalar_select %p44, 0, %s43
      %s46 = ssub.s32 %s33, %s45
      %s47 = ssub.s32 %s34, %s41
      %s48 = sor.u32 %s46, %s47
      %p49 = scmp.eq.s32.totalorder %s48, 0
      %s51 = sadd.s32 %s50, 1
      %s52 = scalar_select %p49, %s50, %s51
      %p55 = pneg %p49
      %p56 = scmp.eq.s32.totalorder %s26, 1
      %p57 = por %p55, %p56
      %p58 = scmp.ne.s32.totalorder %s50, %s53
      %p59 = scmp.eq.s32.totalorder %s26, 0
      %p60 = por %p58, %p59
      %p61 = scmp.ne.s32.totalorder %s50, %s53
      %p62 = scmp.eq.s32.totalorder %s31, 1
      %p63 = por %p61, %p62
      %p64 = scmp.ne.s32.totalorder %s53, %s54
      %p65 = scmp.eq.s32.totalorder %s31, 0
      %p66 = por %p64, %p65
      %p67 = scmp.ne.s32.totalorder %s53, %s54
      %p68 = scmp.eq.s32.totalorder %s32, 1
      %p69 = por %p67, %p68
      %p71 = scmp.ne.s32.totalorder %s54, %s70
      %p72 = scmp.eq.s32.totalorder %s32, 0
      %p73 = por %p71, %p72
      %s74 = ssub.s32 %s33, %s45
      %p75 = scmp.eq.s32.totalorder %s74, 0
      %s77 = sadd.s32 %s76, 1
      %s78 = scalar_select %p75, %s76, %s77
      %p81 = pneg %p75
      %p82 = scmp.eq.s32.totalorder %s26, 1
      %p83 = por %p81, %p82
      %p84 = scmp.ne.s32.totalorder %s76, %s79
      %p85 = scmp.eq.s32.totalorder %s26, 0
      %p86 = por %p84, %p85
      %p87 = scmp.ne.s32.totalorder %s76, %s79
      %p88 = scmp.eq.s32.totalorder %s31, 1
      %p89 = por %p87, %p88
      %p90 = scmp.ne.s32.totalorder %s79, %s80
      %p91 = scmp.eq.s32.totalorder %s31, 0
      %p92 = por %p90, %p91
      %p93 = scmp.ne.s32.totalorder %s79, %s80
      %p94 = scmp.eq.s32.totalorder %s32, 1
      %p95 = por %p93, %p94
      %p97 = scmp.ne.s32.totalorder %s80, %s96
      %p98 = scmp.eq.s32.totalorder %s32, 0
      %p99 = por %p97, %p98
      %s101 = sadd.s32 %s100, 1
      %p104 = scmp.eq.s32.totalorder %s26, 1
      %p105 = scmp.ne.s32.totalorder %s100, %s102
      %p106 = scmp.eq.s32.totalorder %s26, 0
      %p107 = por %p105, %p106
      %p108 = scmp.ne.s32.totalorder %s100, %s102
      %p109 = scmp.eq.s32.totalorder %s31, 1
      %p110 = por %p108, %p109
      %p111 = scmp.ne.s32.totalorder %s102, %s103
      %p112 = scmp.eq.s32.totalorder %s31, 0
      %p113 = por %p111, %p112
      %p114 = scmp.ne.s32.totalorder %s102, %s103
      %p115 = scmp.eq.s32.totalorder %s32, 1
      %p116 = por %p114, %p115
      %p118 = scmp.ne.s32.totalorder %s103, %s117
      %p119 = scmp.eq.s32.totalorder %s32, 0
      %p120 = por %p118, %p119
      %s122 = sadd.s32 %s121, 1
      %p125 = scmp.eq.s32.totalorder %s26, 1
      %p126 = scmp.ne.s32.totalorder %s121, %s123
      %p127 = scmp.eq.s32.totalorder %s26, 0
      %p128 = por %p126, %p127
      %p129 = scmp.ne.s32.totalorder %s121, %s123
      %p130 = scmp.eq.s32.totalorder %s31, 1
      %p131 = por %p129, %p130
      %p132 = scmp.ne.s32.totalorder %s123, %s124
      %p133 = scmp.eq.s32.totalorder %s31, 0
      %p134 = por %p132, %p133
      %p135 = scmp.ne.s32.totalorder %s123, %s124
      %p136 = scmp.eq.s32.totalorder %s32, 1
      %p137 = por %p135, %p136
      %p139 = scmp.ne.s32.totalorder %s124, %s138
      %p140 = scmp.eq.s32.totalorder %s32, 0
      %p141 = por %p139, %p140
      %s143 = sadd.s32 %s142, 1
      %p146 = scmp.eq.s32.totalorder %s26, 1
      %p147 = scmp.ne.s32.totalorder %s142, %s144
      %p148 = scmp.eq.s32.totalorder %s26, 0
      %p149 = por %p147, %p148
      %p150 = scmp.ne.s32.totalorder %s142, %s144
      %p151 = scmp.eq.s32.totalorder %s31, 1
      %p152 = por %p150, %p151
      %p153 = scmp.ne.s32.totalorder %s144, %s145
      %p154 = scmp.eq.s32.totalorder %s31, 0
      %p155 = por %p153, %p154
      %p156 = scmp.ne.s32.totalorder %s144, %s145
      %p157 = scmp.eq.s32.totalorder %s32, 1
      %p158 = por %p156, %p157
      %p160 = scmp.ne.s32.totalorder %s145, %s159
      %p161 = scmp.eq.s32.totalorder %s32, 0
      %p162 = por %p160, %p161
      %s164 = sadd.s32 %s163, 1
      %p167 = scmp.eq.s32.totalorder %s26, 1
      %p168 = scmp.ne.s32.totalorder %s163, %s165
      %p169 = scmp.eq.s32.totalorder %s26, 0
      %p170 = por %p168, %p169
      %p171 = scmp.ne.s32.totalorder %s163, %s165
      %p172 = scmp.eq.s32.totalorder %s31, 1
      %p173 = por %p171, %p172
      %p174 = scmp.ne.s32.totalorder %s165, %s166
      %p175 = scmp.eq.s32.totalorder %s31, 0
      %p176 = por %p174, %p175
      %p177 = scmp.ne.s32.totalorder %s165, %s166
      %p178 = scmp.eq.s32.totalorder %s32, 1
      %p179 = por %p177, %p178
      %p181 = scmp.ne.s32.totalorder %s166, %s180
      %p182 = scmp.eq.s32.totalorder %s32, 0
      %p183 = por %p181, %p182
      %s185 = sadd.s32 %s184, 1
      %p188 = scmp.eq.s32.totalorder %s26, 1
      %p189 = scmp.ne.s32.totalorder %s184, %s186
      %p190 = scmp.eq.s32.totalorder %s26, 0
      %p191 = por %p189, %p190
      %p192 = scmp.ne.s32.totalorder %s184, %s186
      %p193 = scmp.eq.s32.totalorder %s31, 1
      %p194 = por %p192, %p193
      %p195 = scmp.ne.s32.totalorder %s186, %s187
      %p196 = scmp.eq.s32.totalorder %s31, 0
      %p197 = por %p195, %p196
      %p198 = scmp.ne.s32.totalorder %s186, %s187
      %p199 = scmp.eq.s32.totalorder %s32, 1
      %p200 = por %p198, %p199
      %p202 = scmp.ne.s32.totalorder %s187, %s201
      %p203 = scmp.eq.s32.totalorder %s32, 0
      %p204 = por %p202, %p203
      %s206 = sadd.s32 %s205, 1
      %p209 = scmp.eq.s32.totalorder %s26, 1
      %p210 = scmp.ne.s32.totalorder %s205, %s207
      %p211 = scmp.eq.s32.totalorder %s26, 0
      %p212 = por %p210, %p211
      %p213 = scmp.ne.s32.totalorder %s205, %s207
      %p214 = scmp.eq.s32.totalorder %s31, 1
      %p215 = por %p213, %p214
      %p216 = scmp.ne.s32.totalorder %s207, %s208
      %p217 = scmp.eq.s32.totalorder %s31, 0
      %p218 = por %p216, %p217
      %p219 = scmp.ne.s32.totalorder %s207, %s208
      %p220 = scmp.eq.s32.totalorder %s32, 1
      %p221 = por %p219, %p220
      %p223 = scmp.ne.s32.totalorder %s208, %s222
      %p224 = scmp.eq.s32.totalorder %s32, 0
      %p225 = por %p223, %p224
      %s227 = sadd.s32 %s226, 1
      %p230 = scmp.eq.s32.totalorder %s26, 1
      %p231 = scmp.ne.s32.totalorder %s226, %s228
      %p232 = scmp.eq.s32.totalorder %s26, 0
      %p233 = por %p231, %p232
      %p234 = scmp.ne.s32.totalorder %s226, %s228
      %p235 = scmp.eq.s32.totalorder %s31, 1
      %p236 = por %p234, %p235
      %p237 = scmp.ne.s32.totalorder %s228, %s229
      %p238 = scmp.eq.s32.totalorder %s31, 0
      %p239 = por %p237, %p238
      %p240 = scmp.ne.s32.totalorder %s228, %s229
      %p241 = scmp.eq.s32.totalorder %s32, 1
      %p242 = por %p240, %p241
      %p244 = scmp.ne.s32.totalorder %s229, %s243
      %p245 = scmp.eq.s32.totalorder %s32, 0
      %p246 = por %p244, %p245
      %s248 = sadd.s32 %s247, 1
      %p251 = scmp.eq.s32.totalorder %s26, 1
      %p252 = scmp.ne.s32.totalorder %s247, %s249
      %p253 = scmp.eq.s32.totalorder %s26, 0
      %p254 = por %p252, %p253
      %p255 = scmp.ne.s32.totalorder %s247, %s249
      %p256 = scmp.eq.s32.totalorder %s31, 1
      %p257 = por %p255, %p256
      %p258 = scmp.ne.s32.totalorder %s249, %s250
      %p259 = scmp.eq.s32.totalorder %s31, 0
      %p260 = por %p258, %p259
      %p261 = scmp.ne.s32.totalorder %s249, %s250
      %p262 = scmp.eq.s32.totalorder %s32, 1
      %p263 = por %p261, %p262
      %p265 = scmp.ne.s32.totalorder %s250, %s264
      %p266 = scmp.eq.s32.totalorder %s32, 0
      %p267 = por %p265, %p266
      %s268 = ssub.s32 %s33, %s45
      %s269 = ssub.s32 %s34, %s41
      %s270 = sor.u32 %s268, %s269
      %p271 = scmp.eq.s32.totalorder %s270, 0
      %s273 = sadd.s32 %s272, 1
      %s274 = scalar_select %p271, %s272, %s273
      %p277 = pneg %p271
      %p278 = scmp.eq.s32.totalorder %s26, 1
      %p279 = por %p277, %p278
      %p280 = scmp.ne.s32.totalorder %s272, %s275
      %p281 = scmp.eq.s32.totalorder %s26, 0
      %p282 = por %p280, %p281
      %p283 = scmp.ne.s32.totalorder %s272, %s275
      %p284 = scmp.eq.s32.totalorder %s31, 1
      %p285 = por %p283, %p284
      %p286 = scmp.ne.s32.totalorder %s275, %s276
      %p287 = scmp.eq.s32.totalorder %s31, 0
      %p288 = por %p286, %p287
      %p289 = scmp.ne.s32.totalorder %s275, %s276
      %p290 = scmp.eq.s32.totalorder %s32, 1
      %p291 = por %p289, %p290
      %p293 = scmp.ne.s32.totalorder %s276, %s292
      %p294 = scmp.eq.s32.totalorder %s32, 0
      %p295 = por %p293, %p294
      %p296 = scmp.le.s32.totalorder 1, %s26
      %p297 = scmp.lt.s32.totalorder %s26, 3
      %p298 = pnand %p296, %p297
      %p299 = pneg %p298
      // Predicated region
      $region9: #{tpu_custom_call.1} parent=5 // pred_check
        _
      $region10: #{tpu_custom_call.1} parent=5 // pred_check_branch
        %301 = sbr.rel (%p298) target = $region12
      $region11: #{tpu_custom_call.1} parent=5 // pred_region
        %s302 = ssub.s32 %s26, 1
        // Predicated region
        $region13: #{tpu_custom_call.1} parent=11 // pred_check
          %p303 = pneg %p113
        $region14: #{tpu_custom_call.1} parent=11 // pred_check_branch
          %305 = sbr.rel (%p303) target = $region16
        $region15: #{tpu_custom_call.1} parent=11 // pred_region
          %307 = vsyncadd [#allocation7], 0
          %s308 = sshll.u32 %s2, 4
          %s309 = int_to_ptr.hbm [resolvable:$true] %s308
          %s310 = sshll.u32 [#allocation8], 4
          %s311 = int_to_ptr.vmem [resolvable:$true] %s310
          %316 = dma.hbm_to_vmem [thread:$0]  %s309, 256, %s311, [#allocation7], 64, 64, 4
        $region16: #{tpu_custom_call.1} parent=11 // pred_fallthru
          _
        // Predicated region
        $region17: #{tpu_custom_call.1} parent=11 // pred_check
          %p317 = pneg %p134
        $region18: #{tpu_custom_call.1} parent=11 // pred_check_branch
          %319 = sbr.rel (%p317) target = $region20
        $region19: #{tpu_custom_call.1} parent=11 // pred_region
          _
        $region20: #{tpu_custom_call.1} parent=11 // pred_fallthru
          _
        // Predicated region
        $region21: #{tpu_custom_call.1} parent=11 // pred_check
          %p320 = pneg %p155
        $region22: #{tpu_custom_call.1} parent=11 // pred_check_branch
          %322 = sbr.rel (%p320) target = $region24
        $region23: #{tpu_custom_call.1} parent=11 // pred_region
          %324 = vsyncadd [#allocation10], 0
          %s325 = sshll.u32 %s4, 4
          %s326 = int_to_ptr.hbm [resolvable:$true] %s325
          %s327 = sshll.u32 [#allocation9], 4
          %s328 = int_to_ptr.vmem [resolvable:$true] %s327
          %333 = dma.hbm_to_vmem [thread:$0]  %s326, 256, %s328, [#allocation10], 64, 64, 4
        $region24: #{tpu_custom_call.1} parent=11 // pred_fallthru
          _
        // Predicated region
        $region25: #{tpu_custom_call.1} parent=11 // pred_check
          %p334 = pneg %p176
        $region26: #{tpu_custom_call.1} parent=11 // pred_check_branch
          %336 = sbr.rel (%p334) target = $region28
        $region27: #{tpu_custom_call.1} parent=11 // pred_region
          _
        $region28: #{tpu_custom_call.1} parent=11 // pred_fallthru
          _
        // Predicated region
        $region29: #{tpu_custom_call.1} parent=11 // pred_check
          %p337 = pneg %p197
        $region30: #{tpu_custom_call.1} parent=11 // pred_check_branch
          %339 = sbr.rel (%p337) target = $region32
        $region31: #{tpu_custom_call.1} parent=11 // pred_region
          %341 = vsyncadd [#allocation10], 0
          %s342 = sshll.u32 %s6, 4
          %s343 = int_to_ptr.hbm [resolvable:$true] %s342
          %s344 = sshll.u32 [#allocation11], 4
          %s345 = int_to_ptr.vmem [resolvable:$true] %s344
          %350 = dma.hbm_to_vmem [thread:$0]  %s343, 256, %s345, [#allocation10], 64, 64, 4
        $region32: #{tpu_custom_call.1} parent=11 // pred_fallthru
          _
        // Predicated region
        $region33: #{tpu_custom_call.1} parent=11 // pred_check
          %p351 = pneg %p218
        $region34: #{tpu_custom_call.1} parent=11 // pred_check_branch
          %353 = sbr.rel (%p351) target = $region36
        $region35: #{tpu_custom_call.1} parent=11 // pred_region
          _
        $region36: #{tpu_custom_call.1} parent=11 // pred_fallthru
          _
        // Predicated region
        $region37: #{tpu_custom_call.1} parent=11 // pred_check
          %p354 = pneg %p239
        $region38: #{tpu_custom_call.1} parent=11 // pred_check_branch
          %356 = sbr.rel (%p354) target = $region40
        $region39: #{tpu_custom_call.1} parent=11 // pred_region
          _
        $region40: #{tpu_custom_call.1} parent=11 // pred_fallthru
          _
        // Predicated region
        $region41: #{tpu_custom_call.1} parent=11 // pred_check
          %p357 = pneg %p260
        $region42: #{tpu_custom_call.1} parent=11 // pred_check_branch
          %359 = sbr.rel (%p357) target = $region44
        $region43: #{tpu_custom_call.1} parent=11 // pred_region
          _
        $region44: #{tpu_custom_call.1} parent=11 // pred_fallthru
          _
      $region12: #{tpu_custom_call.1} parent=5 // pred_fallthru
        _
      %p360 = scmp.lt.s32.totalorder %s26, 2
      // Predicated region
      $region45: #{tpu_custom_call.1} parent=5 // pred_check
        %p361 = pneg %p360
      $region46: #{tpu_custom_call.1} parent=5 // pred_check_branch
        %363 = sbr.rel (%p361) target = $region48
      $region47: #{tpu_custom_call.1} parent=5 // pred_region
        // Predicated region
        $region49: #{tpu_custom_call.1} parent=47 // pred_check
          %p364 = pneg %p60
        $region50: #{tpu_custom_call.1} parent=47 // pred_check_branch
          %366 = sbr.rel (%p364) target = $region52
        $region51: #{tpu_custom_call.1} parent=47 // pred_region
          %s367 = sand.u32 %s50, 1
          %s368 = scalar_lea.sflag [#allocation4], %s367
          %s369 = sand.u32 %s50, 1
          %s370 = smul.addr %s369, 8
          %s371 = scalar_lea.vmem [#allocation3], %s370
          %373 = vsyncadd %s368, 0
          %s374 = sadd.s32 %s34, %s33
          %s375 = smul.addr %s374, 8
          %s376 = scalar_lea.hbm %s0, %s375
          %s378 = sshll.u32 %s376, 4
          %s379 = int_to_ptr.hbm [resolvable:$true] %s378
          %s380 = sshll.u32 %s371, 4
          %s381 = int_to_ptr.vmem [resolvable:$true] %s380
          %383 = dma.hbm_to_vmem [thread:$0]  %s379, 128, %s381, %s368
        $region52: #{tpu_custom_call.1} parent=47 // pred_fallthru
          _
        // Predicated region
        $region53: #{tpu_custom_call.1} parent=47 // pred_check
          %p384 = pneg %p86
        $region54: #{tpu_custom_call.1} parent=47 // pred_check_branch
          %386 = sbr.rel (%p384) target = $region56
        $region55: #{tpu_custom_call.1} parent=47 // pred_region
          %s387 = sand.u32 %s26, 1
          %s388 = scalar_lea.sflag [#allocation7], %s387
          %s389 = sand.u32 %s76, 1
          %s390 = smul.addr %s389, 4
          %s391 = scalar_lea.vmem [#allocation6], %s390
          %393 = vsyncadd %s388, 0
          %s394 = smul.addr %s33, 4
          %s395 = scalar_lea.hbm %s1, %s394
          %s397 = sshll.u32 %s395, 4
          %s398 = int_to_ptr.hbm [resolvable:$true] %s397
          %s399 = sshll.u32 %s391, 4
          %s400 = int_to_ptr.vmem [resolvable:$true] %s399
          %402 = dma.hbm_to_vmem [thread:$0]  %s398, 64, %s400, %s388
        $region56: #{tpu_custom_call.1} parent=47 // pred_fallthru
          _
      $region48: #{tpu_custom_call.1} parent=5 // pred_fallthru
        _
      %p403 = scmp.le.s32.totalorder 1, %s26
      %p404 = scmp.lt.s32.totalorder %s26, 3
      %p405 = pnand %p403, %p404
      %p406 = pneg %p405
      // Predicated region
      $region57: #{tpu_custom_call.1} parent=5 // pred_check
        _
      $region58: #{tpu_custom_call.1} parent=5 // pred_check_branch
        %408 = sbr.rel (%p405) target = $region60
      $region59: #{tpu_custom_call.1} parent=5 // pred_region
        %s409 = ssub.s32 %s26, 1
        %s410 = sand.u32 %s53, 1
        %s411 = scalar_lea.sflag [#allocation4], %s410
        %s412 = sand.u32 %s53, 1
        %s413 = smul.addr %s412, 8
        %s414 = scalar_lea.vmem [#allocation3], %s413
        // Predicated region
        $region61: #{tpu_custom_call.1} parent=59 // pred_check
          %p415 = pneg %p66
        $region62: #{tpu_custom_call.1} parent=59 // pred_check_branch
          %417 = sbr.rel (%p415) target = $region64
        $region63: #{tpu_custom_call.1} parent=59 // pred_region
          %419 = dma.done %s411, 128
        $region64: #{tpu_custom_call.1} parent=59 // pred_fallthru
          _
        %s420 = sand.u32 %s31, 1
        %s421 = scalar_lea.sflag [#allocation7], %s420
        %s422 = sand.u32 %s79, 1
        %s423 = smul.addr %s422, 4
        %s424 = scalar_lea.vmem [#allocation6], %s423
        // Predicated region
        $region65: #{tpu_custom_call.1} parent=59 // pred_check
          %p425 = pneg %p92
        $region66: #{tpu_custom_call.1} parent=59 // pred_check_branch
          %427 = sbr.rel (%p425) target = $region68
        $region67: #{tpu_custom_call.1} parent=59 // pred_region
          %429 = dma.done %s421, 64
        $region68: #{tpu_custom_call.1} parent=59 // pred_fallthru
          _
        // Predicated region
        $region69: #{tpu_custom_call.1} parent=59 // pred_check
          %p430 = pneg %p113
        $region70: #{tpu_custom_call.1} parent=59 // pred_check_branch
          %432 = sbr.rel (%p430) target = $region72
        $region71: #{tpu_custom_call.1} parent=59 // pred_region
          %434 = dma.done [#allocation7], 256
        $region72: #{tpu_custom_call.1} parent=59 // pred_fallthru
          _
        // Predicated region
        $region73: #{tpu_custom_call.1} parent=59 // pred_check
          %p435 = pneg %p155
        $region74: #{tpu_custom_call.1} parent=59 // pred_check_branch
          %437 = sbr.rel (%p435) target = $region76
        $region75: #{tpu_custom_call.1} parent=59 // pred_region
          %439 = dma.done [#allocation10], 256
        $region76: #{tpu_custom_call.1} parent=59 // pred_fallthru
          _
        // Predicated region
        $region77: #{tpu_custom_call.1} parent=59 // pred_check
          %p440 = pneg %p197
        $region78: #{tpu_custom_call.1} parent=59 // pred_check_branch
          %442 = sbr.rel (%p440) target = $region80
        $region79: #{tpu_custom_call.1} parent=59 // pred_region
          %444 = dma.done [#allocation10], 256
        $region80: #{tpu_custom_call.1} parent=59 // pred_fallthru
          _
        %s445 = sand.u32 %s53, 1
        %s446 = scalar_lea.sflag [#allocation4], %s445
        %s447 = sand.u32 %s53, 1
        %s448 = smul.addr %s447, 8
        %s449 = scalar_lea.vmem [#allocation3], %s448
        %p450 = pneg %p66
        %p451 = pneg %p63
        %s452 = sand.u32 %s31, 1
        %s453 = scalar_lea.sflag [#allocation7], %s452
        %s454 = sand.u32 %s79, 1
        %s455 = smul.addr %s454, 4
        %s456 = scalar_lea.vmem [#allocation6], %s455
        %p457 = pneg %p92
        %p458 = pneg %p89
        %p459 = pneg %p113
        %p460 = pneg %p110
        %p461 = pneg %p134
        %p462 = pneg %p131
        %p463 = pneg %p155
        %p464 = pneg %p152
        %p465 = pneg %p176
        %p466 = pneg %p173
        %p467 = pneg %p197
        %p468 = pneg %p194
        %p469 = pneg %p218
        %p470 = pneg %p215
        %p471 = pneg %p239
        %p472 = pneg %p236
        %p473 = pneg %p260
        %p474 = pneg %p257
        %p475 = pneg %p288
        %p476 = pneg %p285
        %s477 = sand.u32 %s275, 1
        %s478 = scalar_lea.sflag [#allocation5], %s477
        %s479 = sand.u32 %s275, 1
        %s480 = smul.addr %s479, 8
        %s481 = scalar_lea.vmem [#allocation12], %s480
        %p483 = scmp.eq.s32.totalorder %s36, 0
        // Predicated region
        $region81: #{tpu_custom_call.1} parent=59 // pred_check
          %p484 = pneg %p483
        $region82: #{tpu_custom_call.1} parent=59 // pred_check_branch
          %486 = sbr.rel (%p484) target = $region84
        $region83: #{tpu_custom_call.1} parent=59 // pred_region
          %v487 = vld [vmem:[%s424] sm:$0xf]
          %v488 = vld [vmem:[#allocation9] sm:$0xf]
          %v489 = vld [vmem:[#allocation9 + $0x4] sm:$0xf]
          %v490 = vld [vmem:[#allocation9 + $0x8] sm:$0xf]
          %v491 = vld [vmem:[#allocation9 + $0xc] sm:$0xf]
          %v492 = vld [vmem:[%s5] sm:$0x1]
          %v494 = vperm.slane %v492, 0
          %v500 = vunpack.c.l.b16 %v488
          %v501 = vunpack.c.l.b16 %v489
          %v502 = vunpack.c.l.b16 %v490
          %v503 = vunpack.c.l.b16 %v491
          %v504 = vpack.c.b16 %v501, %v500
          %v505 = vpack.c.b16 %v503, %v502
          %vm508 = vcmask 261120
          %v510 = vsel %vm508, %v487, 0
          %512 = vmatpush.bf16.msra.mxu0 0
          %513 = vmatpush.bf16.msra.mxu0 0
          %514 = vmatpush.bf16.msra.mxu0 0
          %515 = vmatpush.bf16.msra.mxu0 0
          %516 = vmatpush.bf16.msra.mxu0 0
          %517 = vmatpush.bf16.msra.mxu0 0
          %518 = vmatpush.bf16.msra.mxu0 %v505
          %519 = vmatpush.bf16.msra.mxu0 %v504
          %520 = vmatmul.bf16.gmra.mxu0 %v510
          %v521 = vpop.f32.mrf.mxu0
          %v522 = vadd.f32 %v494, %v521
          %v523 = vpop.f32.mrf.mxu0
          %524 = vdwg.mxu0
          %v525 = vpack.c.bf16 %v522, %v522
          %vm526 = vcmask 519168
          %527 = vst.msk [vmem:[#allocation2] sm:$0xf] %vm526, %v525
        $region84: #{tpu_custom_call.1} parent=59 // pred_fallthru
          _
        %v528 = vld [vmem:[%s414] sm:$0xff]
        %v529 = vpack.c.bf16 %v528, %v528
        %v530 = vld [vmem:[#allocation8] sm:$0xf]
        %v531 = vld [vmem:[#allocation8 + $0x4] sm:$0xf]
        %v532 = vld [vmem:[#allocation8 + $0x8] sm:$0xf]
        %v533 = vld [vmem:[#allocation8 + $0xc] sm:$0xf]
        %v534 = vld [vmem:[%s3] sm:$0x1]
        %v536 = vperm.slane %v534, 0
        %v542 = vunpack.c.l.b16 %v530
        %v543 = vunpack.c.l.b16 %v531
        %v544 = vunpack.c.l.b16 %v532
        %v545 = vunpack.c.l.b16 %v533
        %v546 = vpack.c.b16 %v543, %v542
        %v547 = vpack.c.b16 %v545, %v544
        %vm550 = vcmask 261120
        %v552 = vsel %vm550, %v529, 0
        %554 = vmatpush.bf16.msra.mxu0 0
        %555 = vmatpush.bf16.msra.mxu0 0
        %556 = vmatpush.bf16.msra.mxu0 0
        %557 = vmatpush.bf16.msra.mxu0 0
        %558 = vmatpush.bf16.msra.mxu0 0
        %559 = vmatpush.bf16.msra.mxu0 0
        %560 = vmatpush.bf16.msra.mxu0 %v547
        %561 = vmatpush.bf16.msra.mxu0 %v546
        %562 = vmatmul.bf16.gmra.mxu0 %v552
        %v563 = vpop.f32.mrf.mxu0
        %v564 = vadd.f32 %v536, %v563
        %v565 = vpop.f32.mrf.mxu0
        %566 = vdwg.mxu0
        %v567 = vpack.c.bf16 %v564, %v564
        %v568 = vld [vmem:[#allocation2] sm:$0xf]
        %570 = vrot.lane.b32.xlu0 %v567, 120
        %v571 = vpop.permute.xlu0 %570
        %572 = vrot.lane.b32.xlu0 %v567, 112
        %v573 = vpop.permute.xlu0 %572
        %574 = vrot.lane.b32.xlu0 %v567, 104
        %v575 = vpop.permute.xlu0 %574
        %577 = vrot.lane.b32.xlu0 %v568, 120
        %v578 = vpop.permute.xlu0 %577
        %579 = vrot.lane.b32.xlu0 %v568, 112
        %v580 = vpop.permute.xlu0 %579
        %581 = vrot.lane.b32.xlu0 %v568, 104
        %v582 = vpop.permute.xlu0 %581
        %vm583 = vcmask 64512
        %v585 = vsel %vm583, %v567, 0
        %v588 = vsel %vm583, %v568, 0
        %590 = vmatpush.bf16.xpose.msra.mxu0 0
        %591 = vmatpush.bf16.xpose.msra.mxu0 0
        %592 = vmatpush.bf16.xpose.msra.mxu0 0
        %593 = vmatpush.bf16.xpose.msra.mxu0 0
        %594 = vmatpush.bf16.xpose.msra.mxu0 0
        %595 = vmatpush.bf16.xpose.msra.mxu0 0
        %596 = vmatpush.bf16.xpose.msra.mxu0 0
        %597 = vmatpush.bf16.xpose.msra.mxu0 %v588
        %598 = vmatmul.bf16.gmra.mxu0 %v585
        %v599 = vpop.f32.mrf.mxu0
        %v600 = vadd.f32 0.0, %v599
        %v601 = vpop.f32.mrf.mxu0
        %602 = vdwg.mxu0
        %v604 = vsel %vm583, %v571, 0
        %v607 = vsel %vm583, %v578, 0
        %609 = vmatpush.bf16.xpose.msra.mxu0 0
        %610 = vmatpush.bf16.xpose.msra.mxu0 0
        %611 = vmatpush.bf16.xpose.msra.mxu0 0
        %612 = vmatpush.bf16.xpose.msra.mxu0 0
        %613 = vmatpush.bf16.xpose.msra.mxu0 0
        %614 = vmatpush.bf16.xpose.msra.mxu0 0
        %615 = vmatpush.bf16.xpose.msra.mxu0 0
        %616 = vmatpush.bf16.xpose.msra.mxu0 %v607
        %617 = vmatmul.bf16.gmra.mxu0 %v604
        %v618 = vpop.f32.mrf.mxu0
        %v619 = vadd.f32 0.0, %v618
        %v620 = vpop.f32.mrf.mxu0
        %621 = vdwg.mxu0
        %v623 = vsel %vm583, %v573, 0
        %v626 = vsel %vm583, %v580, 0
        %628 = vmatpush.bf16.xpose.msra.mxu0 0
        %629 = vmatpush.bf16.xpose.msra.mxu0 0
        %630 = vmatpush.bf16.xpose.msra.mxu0 0
        %631 = vmatpush.bf16.xpose.msra.mxu0 0
        %632 = vmatpush.bf16.xpose.msra.mxu0 0
        %633 = vmatpush.bf16.xpose.msra.mxu0 0
        %634 = vmatpush.bf16.xpose.msra.mxu0 0
        %635 = vmatpush.bf16.xpose.msra.mxu0 %v626
        %636 = vmatmul.bf16.gmra.mxu0 %v623
        %v637 = vpop.f32.mrf.mxu0
        %v638 = vadd.f32 0.0, %v637
        %v639 = vpop.f32.mrf.mxu0
        %640 = vdwg.mxu0
        %v642 = vsel %vm583, %v575, 0
        %v645 = vsel %vm583, %v582, 0
        %647 = vmatpush.bf16.xpose.msra.mxu0 0
        %648 = vmatpush.bf16.xpose.msra.mxu0 0
        %649 = vmatpush.bf16.xpose.msra.mxu0 0
        %650 = vmatpush.bf16.xpose.msra.mxu0 0
        %651 = vmatpush.bf16.xpose.msra.mxu0 0
        %652 = vmatpush.bf16.xpose.msra.mxu0 0
        %653 = vmatpush.bf16.xpose.msra.mxu0 0
        %654 = vmatpush.bf16.xpose.msra.mxu0 %v645
        %655 = vmatmul.bf16.gmra.mxu0 %v642
        %v656 = vpop.f32.mrf.mxu0
        %v657 = vadd.f32 0.0, %v656
        %v658 = vpop.f32.mrf.mxu0
        %659 = vdwg.mxu0
        %v660 = vsel %vm583, %v600, -inf
        %661 = vmax.xlane.f32.xlu0 %v660
        %v662 = vpop.xlane.xlu0 %661
        %v663 = vsel %vm583, %v619, -inf
        %664 = vmax.xlane.f32.xlu0 %v663
        %v665 = vpop.xlane.xlu0 %664
        %v666 = vsel %vm583, %v638, -inf
        %667 = vmax.xlane.f32.xlu0 %v666
        %v668 = vpop.xlane.xlu0 %667
        %v669 = vsel %vm583, %v657, -inf
        %670 = vmax.xlane.f32.xlu0 %v669
        %v671 = vpop.xlane.xlu0 %670
        %v672 = vsub.f32 %v600, %v662
        %v673 = vsub.f32 %v619, %v665
        %v674 = vsub.f32 %v638, %v668
        %v675 = vsub.f32 %v657, %v671
        %v676 = vmul.f32 %v672, 1.442695
        %v677 = vpow.pop %v676
        %v678 = vmul.f32 %v673, 1.442695
        %v679 = vpow.pop %v678
        %v680 = vmul.f32 %v674, 1.442695
        %v681 = vpow.pop %v680
        %v682 = vmul.f32 %v675, 1.442695
        %v683 = vpow.pop %v682
        %v684 = vsel %vm583, %v677, 0.0
        %685 = vadd.xlane.f32.xlu0 %v684
        %v686 = vpop.xlane.xlu0 %685
        %v687 = vsel %vm583, %v679, 0.0
        %688 = vadd.xlane.f32.xlu0 %v687
        %v689 = vpop.xlane.xlu0 %688
        %v690 = vsel %vm583, %v681, 0.0
        %691 = vadd.xlane.f32.xlu0 %v690
        %v692 = vpop.xlane.xlu0 %691
        %v693 = vsel %vm583, %v683, 0.0
        %694 = vadd.xlane.f32.xlu0 %v693
        %v695 = vpop.xlane.xlu0 %694
        %v696 = vrcp.pop %v686
        %v697 = vrcp.pop %v689
        %v698 = vrcp.pop %v692
        %v699 = vrcp.pop %v695
        %v700 = vmul.f32 %v677, %v696
        %v701 = vmul.f32 %v679, %v697
        %v702 = vmul.f32 %v681, %v698
        %v703 = vmul.f32 %v683, %v699
        %v704 = vpack.c.bf16 %v700, %v700
        %v705 = vpack.c.bf16 %v701, %v701
        %v706 = vpack.c.bf16 %v702, %v702
        %v707 = vpack.c.bf16 %v703, %v703
        %v708 = vunpack.c.l.b16 %v568
        %v709 = vpack.c.b16 %v708, %v708
        %710 = vrot.lane.b32.xlu0 %v709, 96
        %v711 = vpop.permute.xlu0 %710
        %v713 = vsel %vm583, %v704, 0
        %vm715 = vcmask 1043456
        %v717 = vsel %vm715, %v711, 0
        %719 = vmatpush.bf16.msra.mxu0 0
        %720 = vmatpush.bf16.msra.mxu0 0
        %721 = vmatpush.bf16.msra.mxu0 0
        %722 = vmatpush.bf16.msra.mxu0 0
        %723 = vmatpush.bf16.msra.mxu0 0
        %724 = vmatpush.bf16.msra.mxu0 0
        %725 = vmatpush.bf16.msra.mxu0 0
        %726 = vmatpush.bf16.msra.mxu0 %v717
        %727 = vmatmul.bf16.gmra.mxu0 %v713
        %v728 = vpop.f32.mrf.mxu0
        %v729 = vadd.f32 0.0, %v728
        %v730 = vpop.f32.mrf.mxu0
        %731 = vdwg.mxu0
        %v732 = vunpack.c.l.b16 %v578
        %v733 = vpack.c.b16 %v732, %v732
        %734 = vrot.lane.b32.xlu0 %v733, 96
        %v735 = vpop.permute.xlu0 %734
        %v737 = vsel %vm583, %v705, 0
        %v740 = vsel %vm715, %v735, 0
        %742 = vmatpush.bf16.msra.mxu0 0
        %743 = vmatpush.bf16.msra.mxu0 0
        %744 = vmatpush.bf16.msra.mxu0 0
        %745 = vmatpush.bf16.msra.mxu0 0
        %746 = vmatpush.bf16.msra.mxu0 0
        %747 = vmatpush.bf16.msra.mxu0 0
        %748 = vmatpush.bf16.msra.mxu0 0
        %749 = vmatpush.bf16.msra.mxu0 %v740
        %750 = vmatmul.bf16.gmra.mxu0 %v737
        %v751 = vpop.f32.mrf.mxu0
        %v752 = vadd.f32 0.0, %v751
        %v753 = vpop.f32.mrf.mxu0
        %754 = vdwg.mxu0
        %v755 = vunpack.c.l.b16 %v580
        %v756 = vpack.c.b16 %v755, %v755
        %757 = vrot.lane.b32.xlu0 %v756, 96
        %v758 = vpop.permute.xlu0 %757
        %v760 = vsel %vm583, %v706, 0
        %v763 = vsel %vm715, %v758, 0
        %765 = vmatpush.bf16.msra.mxu0 0
        %766 = vmatpush.bf16.msra.mxu0 0
        %767 = vmatpush.bf16.msra.mxu0 0
        %768 = vmatpush.bf16.msra.mxu0 0
        %769 = vmatpush.bf16.msra.mxu0 0
        %770 = vmatpush.bf16.msra.mxu0 0
        %771 = vmatpush.bf16.msra.mxu0 0
        %772 = vmatpush.bf16.msra.mxu0 %v763
        %773 = vmatmul.bf16.gmra.mxu0 %v760
        %v774 = vpop.f32.mrf.mxu0
        %v775 = vadd.f32 0.0, %v774
        %v776 = vpop.f32.mrf.mxu0
        %777 = vdwg.mxu0
        %v778 = vunpack.c.l.b16 %v582
        %v779 = vpack.c.b16 %v778, %v778
        %780 = vrot.lane.b32.xlu0 %v779, 96
        %v781 = vpop.permute.xlu0 %780
        %v783 = vsel %vm583, %v707, 0
        %v786 = vsel %vm715, %v781, 0
        %788 = vmatpush.bf16.msra.mxu0 0
        %789 = vmatpush.bf16.msra.mxu0 0
        %790 = vmatpush.bf16.msra.mxu0 0
        %791 = vmatpush.bf16.msra.mxu0 0
        %792 = vmatpush.bf16.msra.mxu0 0
        %793 = vmatpush.bf16.msra.mxu0 0
        %794 = vmatpush.bf16.msra.mxu0 0
        %795 = vmatpush.bf16.msra.mxu0 %v786
        %796 = vmatmul.bf16.gmra.mxu0 %v783
        %v797 = vpop.f32.mrf.mxu0
        %v798 = vadd.f32 0.0, %v797
        %v799 = vpop.f32.mrf.mxu0
        %800 = vdwg.mxu0
        %v801 = vpack.c.bf16 %v729, %v729
        %v802 = vpack.c.bf16 %v752, %v752
        %v803 = vpack.c.bf16 %v775, %v775
        %v804 = vpack.c.bf16 %v798, %v798
        %v806 = vunpack.c.l.b16 %v802
        %v807 = vpack.c.b16 %v806, %v806
        %808 = vrot.lane.b32.xlu0 %v807, 8
        %v809 = vpop.permute.xlu0 %808
        %v811 = vunpack.c.l.b16 %v803
        %v812 = vpack.c.b16 %v811, %v811
        %813 = vrot.lane.b32.xlu0 %v812, 16
        %v814 = vpop.permute.xlu0 %813
        %v816 = vunpack.c.l.b16 %v804
        %v817 = vpack.c.b16 %v816, %v816
        %818 = vrot.lane.b32.xlu0 %v817, 24
        %v819 = vpop.permute.xlu0 %818
        %v822 = vsel %vm583, %v801, %v809
        %vm823 = vcmask 130048
        %v825 = vsel %vm823, %v822, %v814
        %vm826 = vcmask 195584
        %v828 = vsel %vm826, %v825, %v819
        %v829 = vld [vmem:[#allocation11] sm:$0xf]
        %v830 = vld [vmem:[#allocation11 + $0x4] sm:$0xf]
        %v831 = vld [vmem:[#allocation11 + $0x8] sm:$0xf]
        %v832 = vld [vmem:[#allocation11 + $0xc] sm:$0xf]
        %v833 = vld [vmem:[%s7] sm:$0x1]
        %v835 = vperm.slane %v833, 0
        %v841 = vunpack.c.l.b16 %v829
        %v842 = vunpack.c.l.b16 %v830
        %v843 = vunpack.c.l.b16 %v831
        %v844 = vunpack.c.l.b16 %v832
        %v845 = vpack.c.b16 %v842, %v841
        %v846 = vpack.c.b16 %v844, %v843
        %v849 = vsel %vm550, %v828, 0
        %851 = vmatpush.bf16.msra.mxu0 0
        %852 = vmatpush.bf16.msra.mxu0 0
        %853 = vmatpush.bf16.msra.mxu0 0
        %854 = vmatpush.bf16.msra.mxu0 0
        %855 = vmatpush.bf16.msra.mxu0 0
        %856 = vmatpush.bf16.msra.mxu0 0
        %857 = vmatpush.bf16.msra.mxu0 %v846
        %858 = vmatpush.bf16.msra.mxu0 %v845
        %859 = vmatmul.bf16.gmra.mxu0 %v849
        %v860 = vpop.f32.mrf.mxu0
        %v861 = vadd.f32 %v835, %v860
        %v862 = vpop.f32.mrf.mxu0
        %863 = vdwg.mxu0
        %v864 = vadd.f32 %v861, %v528
        %v865 = vsel %vm550, %v864, 0.0
        %866 = vadd.xlane.f32.xlu0 %v865
        %v867 = vpop.xlane.xlu0 %866
        %v868 = vrcp.pop 32.0
        %v869 = vmul.f32 32.0, %v868
        %v870 = vsub.f32 1.0, %v869
        %v871 = vmul.f32 %v868, %v870
        %v872 = vadd.f32 %v868, %v871
        %vm873 = vweird.f32 %v868
        %v874 = vsel %vm873, %v868, %v872
        %v875 = vmul.f32 %v867, %v874
        %v876 = vsub.f32 %v864, %v875
        %v877 = vmul.f32 %v876, %v876
        %v878 = vsel %vm550, %v877, 0.0
        %879 = vadd.xlane.f32.xlu0 %v878
        %v880 = vpop.xlane.xlu0 %879
        %v881 = vmul.f32 %v880, %v874
        %v882 = vadd.f32 %v881, 1e-12
        %v883 = vrsqrt.pop %v882
        %v884 = vmul.f32 %v883, %v882
        %v885 = vmul.f32 %v884, %v883
        %v886 = vmul.f32 0.5, %v885
        %v887 = vsub.f32 1.5, %v886
        %v888 = vmul.f32 %v883, %v887
        %vm889 = vweird.f32 %v882
        %vm890 = vweird.f32 %v883
        %vm891 = vmor %vm889, %vm890
        %v892 = vsel %vm891, %v883, %v888
        %v893 = vmul.f32 %v876, %v892
        %v894 = vld [vmem:[%s8] sm:$0x1]
        %v896 = vperm.slane %v894, 0
        %v898 = vmul.f32 %v893, %v896
        %v899 = vld [vmem:[%s9] sm:$0x1]
        %v901 = vperm.slane %v899, 0
        %v903 = vadd.f32 %v898, %v901
        %904 = vst.msk [vmem:[%s481] sm:$0xff] %vm550, %v903
        %s905 = sand.u32 %s275, 1
        %s906 = scalar_lea.sflag [#allocation5], %s905
        %s907 = sand.u32 %s275, 1
        %s908 = smul.addr %s907, 8
        %s909 = scalar_lea.vmem [#allocation12], %s908
        // Predicated region
        $region85: #{tpu_custom_call.1} parent=59 // pred_check
          %p910 = pneg %p285
        $region86: #{tpu_custom_call.1} parent=59 // pred_check_branch
          %912 = sbr.rel (%p910) target = $region88
        $region87: #{tpu_custom_call.1} parent=59 // pred_region
          %914 = vsyncadd %s906, 0
          %s915 = sadd.s32 %s36, %s35
          %s916 = smul.addr %s915, 8
          %s917 = scalar_lea.hbm %s10, %s916
          %s919 = sshll.u32 %s909, 4
          %s920 = int_to_ptr.vmem [resolvable:$true] %s919
          %s921 = sshll.u32 %s917, 4
          %s922 = int_to_ptr.hbm [resolvable:$true] %s921
          %924 = dma.vmem_to_hbm [thread:$0]  %s920, 128, %s922, %s906
        $region88: #{tpu_custom_call.1} parent=59 // pred_fallthru
          _
      $region60: #{tpu_custom_call.1} parent=5 // pred_fallthru
        _
      %p925 = scmp.le.s32.totalorder 2, %s26
      // Predicated region
      $region89: #{tpu_custom_call.1} parent=5 // pred_check
        %p926 = pneg %p925
      $region90: #{tpu_custom_call.1} parent=5 // pred_check_branch
        %928 = sbr.rel (%p926) target = $region92
      $region91: #{tpu_custom_call.1} parent=5 // pred_region
        %s929 = ssub.s32 %s26, 2
        // Predicated region
        $region93: #{tpu_custom_call.1} parent=91 // pred_check
          %p930 = pneg %p291
        $region94: #{tpu_custom_call.1} parent=91 // pred_check_branch
          %932 = sbr.rel (%p930) target = $region96
        $region95: #{tpu_custom_call.1} parent=91 // pred_region
          %s933 = sand.u32 %s276, 1
          %s934 = scalar_lea.sflag [#allocation5], %s933
          %s935 = sand.u32 %s276, 1
          %s936 = smul.addr %s935, 8
          %s937 = scalar_lea.vmem [#allocation12], %s936
          %939 = dma.done %s934, 128
        $region96: #{tpu_custom_call.1} parent=91 // pred_fallthru
          _
      $region92: #{tpu_custom_call.1} parent=5 // pred_fallthru
        _
    $region6: #{tpu_custom_call.1} parent=1 // loop_footer
      %s30 = sadd.s32 1, %s26
    $region7: #{tpu_custom_call.1} parent=1 // loop_footer_branch
      %25 = sbr.rel target = $region3
    $region8: #{tpu_custom_call.1} parent=1 // loop_exit
      _
    %940 = vsyncpa [#allocation4], 1
    %s941 = scalar_lea.sflag [#allocation4], 1
    %942 = vsyncpa %s941, 1
    %943 = vsyncpa [#allocation7], 1
    %s944 = scalar_lea.sflag [#allocation7], 1
    %945 = vsyncpa %s944, 1
    %946 = vsyncpa [#allocation10], 1
    %947 = vsyncpa [#allocation5], 1
    %s948 = scalar_lea.sflag [#allocation5], 1
    %949 = vsyncpa %s948, 1

</llo_original>
